<compile_context>
chip_gen: v5e
topology: v5e:2x2
jax: 0.10.0
libtpu: 0.0.40
codegen_flags: <defaults>
</compile_context>

<pallas_src>
import functools

import jax
import jax.numpy as jnp
from jax.experimental import pallas as pl
from jax.experimental.pallas import tpu as pltpu


def _vq_kernel(x_ref, cbt_ref, cb_ref, csq_ref, mask_ref,
               out_ref, lpart_ref, *, n_seg, quant_n_embed, vc_pad):
    """One grid step = one tile of TM token rows."""
    cbt = cbt_ref[...]                                  # (D_pad, Vc_pad) matmul dtype
    x_mm = x_ref[...].astype(cbt.dtype)                 # (TM, D_pad)
    csq = csq_ref[...]                                  # (1, Vc_pad) f32

    # score = ||c||^2 - 2 x.c ; per-row argmin(score) == argmin(||x - c||^2)
    # (the ||x||^2 term is constant per row and dropped).
    score = csq - 2.0 * jnp.dot(x_mm, cbt, preferred_element_type=jnp.float32)

    q = quant_n_embed
    tm = score.shape[0]
    loc = jax.lax.broadcasted_iota(jnp.int32, (tm, q), 1)     # (TM, Q), built once

    # Segment-local one-hot construction (TM*Vc compares total), concatenated
    # into one lane-dense selection matrix for a single wide gather matmul.
    seg_onehots = []
    for s in range(n_seg):                                    # static python loop
        seg = score[:, s * q:(s + 1) * q]                     # (TM, Q) static slice
        seg_min = jnp.min(seg, axis=1, keepdims=True)         # (TM, 1)
        # first index attaining the minimum (matches torch.argmin tie-breaking)
        idx = jnp.min(jnp.where(seg == seg_min, loc, q),
                      axis=1, keepdims=True)                  # (TM, 1)
        seg_onehots.append((loc == idx).astype(jnp.float32))  # (TM, Q)
    if vc_pad > n_seg * q:
        seg_onehots.append(
            jnp.zeros((tm, vc_pad - n_seg * q), jnp.float32))  # padded lanes
    sel = jnp.concatenate(seg_onehots, axis=1)                # (TM, Vc_pad)

    # Gather + average in one MXU matmul (cb is pre-scaled by 1/n_seg on host).
    cb = cb_ref[...]                                          # (Vc_pad, D_pad)
    quantized = jnp.dot(sel.astype(cb.dtype), cb,
                        preferred_element_type=jnp.float32)   # (TM, D_pad) f32
    out_ref[...] = quantized.astype(out_ref.dtype)

    # Per-tile partial of sum(((quantized - x) * mask)^2).  Mask is already
    # squared on the host; padded D columns are zero in both x and quantized.
    m = mask_ref[...]                                         # (TM, 1) f32
    diff = quantized - x_ref[...].astype(jnp.float32)         # re-read x (short live range)
    row_sq = jnp.sum(diff * diff, axis=1, keepdims=True)      # (TM, 1)
    part_sum = jnp.sum(row_sq * m)                            # scalar
    lpart_ref[...] = jnp.full(lpart_ref.shape, part_sum, dtype=jnp.float32)


def _round_up(x, m):
    return (x + m - 1) // m * m


def vector_quantizer_forward(inputs_embeds, attention_mask, embedding_weight,
                             lab_seq_len, commitment_cost, *, tm=512,
                             use_bf16_matmul=False):
    """Returns (quantized, loss) matching the PyTorch VectorQuantizer.forward.

    tm: token-tile size; sweep 256-1024 (v5e: 256-512 is enough; v6e can go
    higher).  Working set per step ~ 2x(TM, D_pad) in/out tiles (double
    buffered) + (TM, Vc_pad) f32 score/sel temps + 2 codebook copies; keep it
    well under the 48 MiB vmem limit set below.
    use_bf16_matmul: run both MXU matmuls in bf16 (f32 accumulation).  2-3x MXU
    time on v6e/v7x, but near-tie argmins may differ from the f32 reference.
    """
    B, S, D = inputs_embeds.shape
    V = embedding_weight.shape[0]
    quant_n_embed = (V - 2) // (lab_seq_len - 1)
    assert (V - 2) % quant_n_embed == 0, "choose V so segments tile evenly"
    n_seg = (V - 2) // quant_n_embed
    Vc = V - 2

    # --- token tiling (even tile count preferred for v7x megacore) ---
    N = B * S
    TM = min(_round_up(tm, 8), _round_up(N, 8))
    n_tiles = -(-N // TM)
    if n_tiles > 1 and n_tiles % 2 == 1:
        tm_try = _round_up(-(-N // (n_tiles + 1)), 8)
        if (-(-N // tm_try)) % 2 == 0:
            TM = tm_try
    n_tiles = -(-N // TM)
    N_pad = n_tiles * TM

    # --- lane padding: D and Vc up to multiples of 128 ---
    D_pad = _round_up(D, 128)
    Vc_pad = _round_up(Vc, 128)

    # Inputs stay in their native dtype; the kernel casts internally.
    x_flat = inputs_embeds.reshape(N, D)
    mask_flat = attention_mask.reshape(N, 1).astype(jnp.float32)
    mask_flat = mask_flat * mask_flat                      # pre-squared on host
    x_flat = jnp.pad(x_flat, ((0, N_pad - N), (0, D_pad - D)))
    mask_flat = jnp.pad(mask_flat, ((0, N_pad - N), (0, 0)))   # padded rows: mask 0

    # Codebook rows 2..V.  Distance copy (transposed, unscaled) + gather copy
    # (pre-scaled by 1/n_seg) + precomputed ||c||^2, all zero-padded to
    # (D_pad, Vc_pad)/(Vc_pad, D_pad).  Padded columns never enter any segment.
    mm_dtype = jnp.bfloat16 if use_bf16_matmul else jnp.float32
    cb_rows = embedding_weight[2:V, :].astype(jnp.float32)             # (Vc, D)
    c_sq = jnp.sum(cb_rows * cb_rows, axis=1)[None, :]                 # (1, Vc)
    cbt = jnp.pad(cb_rows.T.astype(mm_dtype),
                  ((0, D_pad - D), (0, Vc_pad - Vc)))                  # (D_pad, Vc_pad)
    cb_scaled = jnp.pad((cb_rows / float(n_seg)).astype(mm_dtype),
                        ((0, Vc_pad - Vc), (0, D_pad - D)))            # (Vc_pad, D_pad)
    c_sq_pad = jnp.pad(c_sq, ((0, 0), (0, Vc_pad - Vc)))               # (1, Vc_pad)

    kernel = functools.partial(
        _vq_kernel,
        n_seg=n_seg,
        quant_n_embed=quant_n_embed,
        vc_pad=Vc_pad,
    )

    quantized_flat, loss_buf = pl.pallas_call(
        kernel,
        out_shape=(
            jax.ShapeDtypeStruct((N_pad, D_pad), inputs_embeds.dtype),
            jax.ShapeDtypeStruct((n_tiles * 8, 128), jnp.float32),
        ),
        grid_spec=pltpu.PrefetchScalarGridSpec(
            num_scalar_prefetch=0,
            grid=(n_tiles,),
            in_specs=[
                pl.BlockSpec((TM, D_pad), lambda i: (i, 0)),     # x tile
                pl.BlockSpec((D_pad, Vc_pad), lambda i: (0, 0)),  # codebook^T (resident)
                pl.BlockSpec((Vc_pad, D_pad), lambda i: (0, 0)),  # codebook/n (resident)
                pl.BlockSpec((1, Vc_pad), lambda i: (0, 0)),      # ||c||^2    (resident)
                pl.BlockSpec((TM, 1), lambda i: (i, 0)),          # mask^2 tile
            ],
            out_specs=(
                pl.BlockSpec((TM, D_pad), lambda i: (i, 0)),      # quantized tile
                pl.BlockSpec((8, 128), lambda i: (i, 0)),         # per-tile loss partial
            ),
        ),
        compiler_params=pltpu.CompilerParams(
            dimension_semantics=("parallel",),                    # megacore on v7x
            vmem_limit_bytes=48 * 1024 * 1024,                    # headroom vs v7x 64 MiB
        ),
    )(x_flat, cbt, cb_scaled, c_sq_pad, mask_flat)

    # Finish the loss reduction in plain JAX (n_tiles scalars).
    partials = loss_buf[::8, 0]                                   # (n_tiles,)
    mse = jnp.sum(partials) / jnp.float32(N * D)
    loss = (1.0 + commitment_cost) * mse                          # e_latent == q_latent

    quantized = quantized_flat[:N, :D].reshape(B, S, D)
    # straight-through: inputs + stop_grad(quantized - inputs) == quantized (value)
    quantized = inputs_embeds + jax.lax.stop_gradient(quantized - inputs_embeds)
    return quantized, loss


def _reference_forward(inputs_embeds, attention_mask, embedding_weight,
                       lab_seq_len, commitment_cost):
    """Pure-JAX reference mirroring the PyTorch code, for verification."""
    B, S, D = inputs_embeds.shape
    V = embedding_weight.shape[0]
    Q = (V - 2) // (lab_seq_len - 1)
    x = inputs_embeds.reshape(-1, D)
    quantized = jnp.zeros_like(x)
    j = 0.0
    for i in range(0, V - 2, Q):
        c = embedding_weight[i + 2:i + Q + 2, :]
        dist = (jnp.sum(x * x, 1, keepdims=True) + jnp.sum(c * c, 1)[None, :]
                - 2.0 * x @ c.T)
        idx = jnp.argmin(dist, axis=1)
        quantized = quantized + c[idx]
        j += 1.0
    quantized = (quantized / j).reshape(B, S, D)
    m = attention_mask[..., None]
    mse = jnp.mean(((quantized - inputs_embeds) * m) ** 2)
    loss = (1.0 + commitment_cost) * mse
    return quantized, loss


if __name__ == "__main__":
    # Small deterministic setup.
    B, S, D = 2, 8, 32
    lab_seq_len = 5                  # -> 4 codebook segments
    quant_n_embed = 16
    V = quant_n_embed * (lab_seq_len - 1) + 2   # decoder_vocab_size = 66
    commitment_cost = 0.25

    key = jax.random.PRNGKey(0)
    k_x, k_w, k_m = jax.random.split(key, 3)
    inputs_embeds = jax.random.normal(k_x, (B, S, D), dtype=jnp.float32)
    embedding_weight = jax.random.normal(k_w, (V, D), dtype=jnp.float32)
    attention_mask = (jax.random.uniform(k_m, (B, S)) > 0.2).astype(jnp.float32)

    quantized, loss = vector_quantizer_forward(
        inputs_embeds, attention_mask, embedding_weight,
        lab_seq_len, commitment_cost)
    jax.block_until_ready((quantized, loss))

    q_ref, loss_ref = _reference_forward(
        inputs_embeds, attention_mask, embedding_weight,
        lab_seq_len, commitment_cost)

    assert jnp.allclose(quantized, q_ref, rtol=1e-3, atol=1e-3), "quantized mismatch"
    assert jnp.allclose(loss, loss_ref, rtol=1e-3, atol=1e-3), "loss mismatch"

    print("KERNEL_OK")
</pallas_src>

<mosaic_0001>
module attributes {stable_mosaic.version = 11 : i64} {
  func.func @_vq_kernel(%arg0: i32, %arg1: memref<16x128xf32, #tpu.memory_space<vmem>>, %arg2: memref<128x128xf32, #tpu.memory_space<vmem>>, %arg3: memref<128x128xf32, #tpu.memory_space<vmem>>, %arg4: memref<1x128xf32, #tpu.memory_space<vmem>>, %arg5: memref<16x1xf32, #tpu.memory_space<vmem>>, %arg6: memref<16x128xf32, #tpu.memory_space<vmem>>, %arg7: memref<8x128xf32, #tpu.memory_space<vmem>>) attributes {dimension_semantics = [#tpu.dimension_semantics<parallel>], iteration_bounds = array<i64: 1>, scalar_prefetch = 0 : i64, scratch_operands = 0 : i64, tpu.core_type = #tpu.core_type<tc>, window_params = [{transform_indices = @transform_0, window_bounds = array<i64: 16, 128>}, {pipeline_mode = #tpu.pipeline_mode<synchronous>, transform_indices = @transform_1, window_bounds = array<i64: 128, 128>}, {pipeline_mode = #tpu.pipeline_mode<synchronous>, transform_indices = @transform_2, window_bounds = array<i64: 128, 128>}, {pipeline_mode = #tpu.pipeline_mode<synchronous>, transform_indices = @transform_3, window_bounds = array<i64: 1, 128>}, {transform_indices = @transform_4, window_bounds = array<i64: 16, 1>}, {transform_indices = @transform_5, window_bounds = array<i64: 16, 128>}, {transform_indices = @transform_6, window_bounds = array<i64: 8, 128>}]} {
    %c0 = arith.constant 0 : index
    %c0_0 = arith.constant 0 : index
    %0 = vector.load %arg2[%c0, %c0_0] : memref<128x128xf32, #tpu.memory_space<vmem>>, vector<128x128xf32>
    %c0_1 = arith.constant 0 : index
    %c0_2 = arith.constant 0 : index
    %1 = vector.load %arg1[%c0_1, %c0_2] : memref<16x128xf32, #tpu.memory_space<vmem>>, vector<16x128xf32>
    %c0_3 = arith.constant 0 : index
    %c0_4 = arith.constant 0 : index
    %2 = vector.load %arg4[%c0_3, %c0_4] : memref<1x128xf32, #tpu.memory_space<vmem>>, vector<1x128xf32>
    %cst = arith.constant dense<0.000000e+00> : vector<16x128xf32>
    %3 = tpu.matmul %1, %0, %cst {dimension_numbers = #tpu.dot_dimension_numbers<[1], [0], [0], [1], [0, 0, 1, 1], [], []>} : vector<16x128xf32>, vector<128x128xf32>, vector<16x128xf32> -> vector<16x128xf32>
    %cst_5 = arith.constant 2.000000e+00 : f32
    %4 = vector.broadcast %cst_5 : f32 to vector<16x128xf32>
    %5 = arith.mulf %4, %3 : vector<16x128xf32>
    %6 = vector.broadcast %2 : vector<1x128xf32> to vector<16x128xf32>
    %7 = arith.subf %6, %5 : vector<16x128xf32>
    %8 = tpu.iota {dimensions = array<i32: 1>} : vector<16x16xi32>
    %9 = vector.extract_strided_slice %7 {offsets = [0, 0], sizes = [16, 16], strides = [1, 1]} : vector<16x128xf32> to vector<16x16xf32>
    %cst_6 = arith.constant dense<0x7F800000> : vector<16xf32>
    %10 = vector.multi_reduction <minimumf>, %9, %cst_6 [1] : vector<16x16xf32> to vector<16xf32>
    %11 = vector.shape_cast %10 : vector<16xf32> to vector<16x1xf32>
    %12 = vector.broadcast %11 : vector<16x1xf32> to vector<16x16xf32>
    %13 = arith.cmpf oeq, %9, %12 : vector<16x16xf32>
    %c16_i32 = arith.constant 16 : i32
    %14 = vector.broadcast %c16_i32 : i32 to vector<16x16xi32>
    %15 = arith.select %13, %8, %14 : vector<16x16xi1>, vector<16x16xi32>
    %cst_7 = arith.constant dense<2147483647> : vector<16xi32>
    %16 = vector.multi_reduction <minsi>, %15, %cst_7 [1] : vector<16x16xi32> to vector<16xi32>
    %17 = vector.shape_cast %16 : vector<16xi32> to vector<16x1xi32>
    %18 = vector.broadcast %17 : vector<16x1xi32> to vector<16x16xi32>
    %19 = arith.cmpi eq, %8, %18 : vector<16x16xi32>
    %20 = arith.extui %19 : vector<16x16xi1> to vector<16x16xi32>
    %21 = arith.sitofp %20 : vector<16x16xi32> to vector<16x16xf32>
    %22 = vector.extract_strided_slice %7 {offsets = [0, 16], sizes = [16, 16], strides = [1, 1]} : vector<16x128xf32> to vector<16x16xf32>
    %cst_8 = arith.constant dense<0x7F800000> : vector<16xf32>
    %23 = vector.multi_reduction <minimumf>, %22, %cst_8 [1] : vector<16x16xf32> to vector<16xf32>
    %24 = vector.shape_cast %23 : vector<16xf32> to vector<16x1xf32>
    %25 = vector.broadcast %24 : vector<16x1xf32> to vector<16x16xf32>
    %26 = arith.cmpf oeq, %22, %25 : vector<16x16xf32>
    %c16_i32_9 = arith.constant 16 : i32
    %27 = vector.broadcast %c16_i32_9 : i32 to vector<16x16xi32>
    %28 = arith.select %26, %8, %27 : vector<16x16xi1>, vector<16x16xi32>
    %cst_10 = arith.constant dense<2147483647> : vector<16xi32>
    %29 = vector.multi_reduction <minsi>, %28, %cst_10 [1] : vector<16x16xi32> to vector<16xi32>
    %30 = vector.shape_cast %29 : vector<16xi32> to vector<16x1xi32>
    %31 = vector.broadcast %30 : vector<16x1xi32> to vector<16x16xi32>
    %32 = arith.cmpi eq, %8, %31 : vector<16x16xi32>
    %33 = arith.extui %32 : vector<16x16xi1> to vector<16x16xi32>
    %34 = arith.sitofp %33 : vector<16x16xi32> to vector<16x16xf32>
    %35 = vector.extract_strided_slice %7 {offsets = [0, 32], sizes = [16, 16], strides = [1, 1]} : vector<16x128xf32> to vector<16x16xf32>
    %cst_11 = arith.constant dense<0x7F800000> : vector<16xf32>
    %36 = vector.multi_reduction <minimumf>, %35, %cst_11 [1] : vector<16x16xf32> to vector<16xf32>
    %37 = vector.shape_cast %36 : vector<16xf32> to vector<16x1xf32>
    %38 = vector.broadcast %37 : vector<16x1xf32> to vector<16x16xf32>
    %39 = arith.cmpf oeq, %35, %38 : vector<16x16xf32>
    %c16_i32_12 = arith.constant 16 : i32
    %40 = vector.broadcast %c16_i32_12 : i32 to vector<16x16xi32>
    %41 = arith.select %39, %8, %40 : vector<16x16xi1>, vector<16x16xi32>
    %cst_13 = arith.constant dense<2147483647> : vector<16xi32>
    %42 = vector.multi_reduction <minsi>, %41, %cst_13 [1] : vector<16x16xi32> to vector<16xi32>
    %43 = vector.shape_cast %42 : vector<16xi32> to vector<16x1xi32>
    %44 = vector.broadcast %43 : vector<16x1xi32> to vector<16x16xi32>
    %45 = arith.cmpi eq, %8, %44 : vector<16x16xi32>
    %46 = arith.extui %45 : vector<16x16xi1> to vector<16x16xi32>
    %47 = arith.sitofp %46 : vector<16x16xi32> to vector<16x16xf32>
    %48 = vector.extract_strided_slice %7 {offsets = [0, 48], sizes = [16, 16], strides = [1, 1]} : vector<16x128xf32> to vector<16x16xf32>
    %cst_14 = arith.constant dense<0x7F800000> : vector<16xf32>
    %49 = vector.multi_reduction <minimumf>, %48, %cst_14 [1] : vector<16x16xf32> to vector<16xf32>
    %50 = vector.shape_cast %49 : vector<16xf32> to vector<16x1xf32>
    %51 = vector.broadcast %50 : vector<16x1xf32> to vector<16x16xf32>
    %52 = arith.cmpf oeq, %48, %51 : vector<16x16xf32>
    %c16_i32_15 = arith.constant 16 : i32
    %53 = vector.broadcast %c16_i32_15 : i32 to vector<16x16xi32>
    %54 = arith.select %52, %8, %53 : vector<16x16xi1>, vector<16x16xi32>
    %cst_16 = arith.constant dense<2147483647> : vector<16xi32>
    %55 = vector.multi_reduction <minsi>, %54, %cst_16 [1] : vector<16x16xi32> to vector<16xi32>
    %56 = vector.shape_cast %55 : vector<16xi32> to vector<16x1xi32>
    %57 = vector.broadcast %56 : vector<16x1xi32> to vector<16x16xi32>
    %58 = arith.cmpi eq, %8, %57 : vector<16x16xi32>
    %59 = arith.extui %58 : vector<16x16xi1> to vector<16x16xi32>
    %60 = arith.sitofp %59 : vector<16x16xi32> to vector<16x16xf32>
    %cst_17 = arith.constant 0.000000e+00 : f32
    %61 = vector.broadcast %cst_17 : f32 to vector<16x64xf32>
    %62 = tpu.concatenate %21, %34, %47, %60, %61 in 1 : vector<16x16xf32>, vector<16x16xf32>, vector<16x16xf32>, vector<16x16xf32>, vector<16x64xf32> -> vector<16x128xf32>
    %c0_18 = arith.constant 0 : index
    %c0_19 = arith.constant 0 : index
    %63 = vector.load %arg3[%c0_18, %c0_19] : memref<128x128xf32, #tpu.memory_space<vmem>>, vector<128x128xf32>
    %cst_20 = arith.constant dense<0.000000e+00> : vector<16x128xf32>
    %64 = tpu.matmul %62, %63, %cst_20 {dimension_numbers = #tpu.dot_dimension_numbers<[1], [0], [0], [1], [0, 0, 1, 1], [], []>} : vector<16x128xf32>, vector<128x128xf32>, vector<16x128xf32> -> vector<16x128xf32>
    %c0_21 = arith.constant 0 : index
    %c0_22 = arith.constant 0 : index
    %65 = vector.load %arg6[%c0_21, %c0_22] : memref<16x128xf32, #tpu.memory_space<vmem>>, vector<16x128xf32>
    tpu.vector_store %arg6[%c0_21, %c0_22], %64 {strides = array<i32>} : memref<16x128xf32, #tpu.memory_space<vmem>>, vector<16x128xf32>,
    %c0_23 = arith.constant 0 : index
    %c0_24 = arith.constant 0 : index
    %66 = vector.load %arg5[%c0_23, %c0_24] : memref<16x1xf32, #tpu.memory_space<vmem>>, vector<16x1xf32>
    %c0_25 = arith.constant 0 : index
    %c0_26 = arith.constant 0 : index
    %67 = vector.load %arg1[%c0_25, %c0_26] : memref<16x128xf32, #tpu.memory_space<vmem>>, vector<16x128xf32>
    %68 = arith.subf %64, %67 : vector<16x128xf32>
    %69 = arith.mulf %68, %68 : vector<16x128xf32>
    %cst_27 = arith.constant dense<0.000000e+00> : vector<16xf32>
    %70 = vector.multi_reduction <add>, %69, %cst_27 [1] : vector<16x128xf32> to vector<16xf32>
    %71 = vector.shape_cast %70 : vector<16xf32> to vector<16x1xf32>
    %72 = arith.mulf %71, %66 : vector<16x1xf32>
    %73 = vector.shape_cast %72 : vector<16x1xf32> to vector<1x16x1xf32>
    %cst_28 = arith.constant dense<0.000000e+00> : vector<1xf32>
    %74 = vector.multi_reduction <add>, %73, %cst_28 [1, 2] : vector<1x16x1xf32> to vector<1xf32>
    %75 = vector.shape_cast %74 : vector<1xf32> to vector<1x1x1xf32>
    %76 = vector.extract %75[0, 0, 0] : f32 from vector<1x1x1xf32>
    %77 = vector.broadcast %76 : f32 to vector<8x128xf32>
    %c0_29 = arith.constant 0 : index
    %c0_30 = arith.constant 0 : index
    %78 = vector.load %arg7[%c0_29, %c0_30] : memref<8x128xf32, #tpu.memory_space<vmem>>, vector<8x128xf32>
    tpu.vector_store %arg7[%c0_29, %c0_30], %77 {strides = array<i32>} : memref<8x128xf32, #tpu.memory_space<vmem>>, vector<8x128xf32>,
    return
  }
  func.func @transform_0(%arg0: i32) -> (i32, i32) {
    %c0_i32 = arith.constant 0 : i32
    %c0_i32_0 = arith.constant 0 : i32
    return %arg0, %c0_i32 : i32, i32
  }
  func.func @transform_1(%arg0: i32) -> (i32, i32) {
    %c0_i32 = arith.constant 0 : i32
    %c0_i32_0 = arith.constant 0 : i32
    %c0_i32_1 = arith.constant 0 : i32
    return %c0_i32, %c0_i32_0 : i32, i32
  }
  func.func @transform_2(%arg0: i32) -> (i32, i32) {
    %c0_i32 = arith.constant 0 : i32
    %c0_i32_0 = arith.constant 0 : i32
    %c0_i32_1 = arith.constant 0 : i32
    return %c0_i32, %c0_i32_0 : i32, i32
  }
  func.func @transform_3(%arg0: i32) -> (i32, i32) {
    %c0_i32 = arith.constant 0 : i32
    %c0_i32_0 = arith.constant 0 : i32
    %c0_i32_1 = arith.constant 0 : i32
    return %c0_i32, %c0_i32_0 : i32, i32
  }
  func.func @transform_4(%arg0: i32) -> (i32, i32) {
    %c0_i32 = arith.constant 0 : i32
    %c0_i32_0 = arith.constant 0 : i32
    return %arg0, %c0_i32 : i32, i32
  }
  func.func @transform_5(%arg0: i32) -> (i32, i32) {
    %c0_i32 = arith.constant 0 : i32
    %c0_i32_0 = arith.constant 0 : i32
    return %arg0, %c0_i32 : i32, i32
  }
  func.func @transform_6(%arg0: i32) -> (i32, i32) {
    %c0_i32 = arith.constant 0 : i32
    %c0_i32_0 = arith.constant 0 : i32
    return %arg0, %c0_i32 : i32, i32
  }
}

</mosaic_0001>

<llo_original>
// kernel: tpu_custom_call.1
$region0: #{tpu_custom_call.1}
  #allocation0 [shape = 'u32[]', space=smem, size = 0x4, offset = 0x4, fixed_abs, tag = 'smem constant byte address 0x4 - core index']
  #allocation1 [shape = 'u32[72,128]{1,0:T(1,128)}', space=vmem, size = 0x9000, scoped, tag = 'internal scratch']
  %s0 = inlined_call_operand.vmem [shape: f32[16,128], index: 0, kind: input, shape index: {}]
  %s1 = inlined_call_operand.hbm [shape: f32[128,128], index: 1, kind: input, shape index: {}]
  %s2 = inlined_call_operand.hbm [shape: f32[128,128], index: 2, kind: input, shape index: {}]
  %s3 = inlined_call_operand.vmem [shape: f32[1,128], index: 3, kind: input, shape index: {}]
  %s4 = inlined_call_operand.vmem [shape: f32[16,1], index: 4, kind: input, shape index: {}]
  %s5 = inlined_call_operand.hbm [shape: f32[16,128], index: 5, kind: output, shape index: {0}]
  %s6 = inlined_call_operand.hbm [shape: f32[8,128], index: 6, kind: output, shape index: {1}]
  %7 = xla_tuple %s5, %s6
  %s8 = sld [smem:[#allocation0]]
  $region46: #{tpu_custom_call.1} parent=0
    _
  %s10 = ssub.s32 1, %s8
  %s11 = scalar_select 0, %s10, %s8
  $region1: #{tpu_custom_call.1} parent=0
    #allocation2 [shape = 'u8[65536]{0}', space=vmem, size = 0x10000, scoped, tag = 'input window, operand 1, single buffered']
    #allocation3 [shape = 's32[1]{0}', space=sflag, size = 0x4, scoped, tag = 'scoped memory for tpu_custom_call.1']
    #allocation4 [shape = 's32[1]{0}', space=sflag, size = 0x4, scoped, tag = 'scoped memory for tpu_custom_call.1']
    #allocation5 [shape = 'u8[65536]{0}', space=vmem, size = 0x10000, scoped, tag = 'input window, operand 2, single buffered']
    #allocation6 [shape = 's32[1]{0}', space=sflag, size = 0x4, scoped, tag = 'scoped memory for tpu_custom_call.1']
    #allocation7 [shape = 'u8[8192]{0}', space=vmem, size = 0x2000, scoped, tag = 'output window, operand 0, single buffered']
    #allocation8 [shape = 'u8[4096]{0}', space=vmem, size = 0x1000, scoped, tag = 'output window, operand 1, single buffered']
    #allocation9 [shape = 's32[1]{0}', space=sflag, size = 0x4, scoped, tag = 'scoped memory for tpu_custom_call.1']
    %12 = vsyncpa [#allocation3], 0
    %13 = vsyncpa [#allocation6], 0
    %14 = vsyncpa [#allocation4], 0
    %15 = vsyncpa [#allocation9], 0
    // Predicated region
    $region2: #{tpu_custom_call.1} parent=1 // pred_check
      _
    $region3: #{tpu_custom_call.1} parent=1 // pred_check_branch
      %17 = sbr.rel (0) target = $region5
    $region4: #{tpu_custom_call.1} parent=1 // pred_region
      _
    $region5: #{tpu_custom_call.1} parent=1 // pred_fallthru
      _
    // Predicated region
    $region6: #{tpu_custom_call.1} parent=1 // pred_check
      _
    $region7: #{tpu_custom_call.1} parent=1 // pred_check_branch
      %19 = sbr.rel (0) target = $region9
    $region8: #{tpu_custom_call.1} parent=1 // pred_region
      %21 = vsyncadd [#allocation3], 0
      %s22 = sshll.u32 %s1, 4
      %s23 = int_to_ptr.hbm [resolvable:$true] %s22
      %s24 = sshll.u32 [#allocation2], 4
      %s25 = int_to_ptr.vmem [resolvable:$true] %s24
      %30 = dma.hbm_to_vmem [thread:$0]  %s23, 2048, %s25, [#allocation3], 128, 128, 8
    $region9: #{tpu_custom_call.1} parent=1 // pred_fallthru
      _
    // Predicated region
    $region10: #{tpu_custom_call.1} parent=1 // pred_check
      _
    $region11: #{tpu_custom_call.1} parent=1 // pred_check_branch
      %32 = sbr.rel (0) target = $region13
    $region12: #{tpu_custom_call.1} parent=1 // pred_region
      %34 = vsyncadd [#allocation6], 0
      %s35 = sshll.u32 %s2, 4
      %s36 = int_to_ptr.hbm [resolvable:$true] %s35
      %s37 = sshll.u32 [#allocation5], 4
      %s38 = int_to_ptr.vmem [resolvable:$true] %s37
      %43 = dma.hbm_to_vmem [thread:$0]  %s36, 2048, %s38, [#allocation6], 128, 128, 8
    $region13: #{tpu_custom_call.1} parent=1 // pred_fallthru
      _
    // Predicated region
    $region14: #{tpu_custom_call.1} parent=1 // pred_check
      _
    $region15: #{tpu_custom_call.1} parent=1 // pred_check_branch
      %45 = sbr.rel (0) target = $region17
    $region16: #{tpu_custom_call.1} parent=1 // pred_region
      _
    $region17: #{tpu_custom_call.1} parent=1 // pred_fallthru
      _
    // Predicated region
    $region18: #{tpu_custom_call.1} parent=1 // pred_check
      _
    $region19: #{tpu_custom_call.1} parent=1 // pred_check_branch
      %47 = sbr.rel (0) target = $region21
    $region20: #{tpu_custom_call.1} parent=1 // pred_region
      _
    $region21: #{tpu_custom_call.1} parent=1 // pred_fallthru
      _
    // Predicated region
    $region22: #{tpu_custom_call.1} parent=1 // pred_check
      _
    $region23: #{tpu_custom_call.1} parent=1 // pred_check_branch
      %49 = sbr.rel (0) target = $region25
    $region24: #{tpu_custom_call.1} parent=1 // pred_region
      %51 = dma.done [#allocation3], 2048
    $region25: #{tpu_custom_call.1} parent=1 // pred_fallthru
      _
    // Predicated region
    $region26: #{tpu_custom_call.1} parent=1 // pred_check
      _
    $region27: #{tpu_custom_call.1} parent=1 // pred_check_branch
      %53 = sbr.rel (0) target = $region29
    $region28: #{tpu_custom_call.1} parent=1 // pred_region
      %55 = dma.done [#allocation6], 2048
    $region29: #{tpu_custom_call.1} parent=1 // pred_fallthru
      _
    %v56 = vld [vmem:[#allocation2] sm:$0xff]
    %v57 = vld [vmem:[#allocation2 + $0x8] sm:$0xff]
    %v58 = vld [vmem:[#allocation2 + $0x10] sm:$0xff]
    %v59 = vld [vmem:[#allocation2 + $0x18] sm:$0xff]
    %v60 = vld [vmem:[#allocation2 + $0x20] sm:$0xff]
    %v61 = vld [vmem:[#allocation2 + $0x28] sm:$0xff]
    %v62 = vld [vmem:[#allocation2 + $0x30] sm:$0xff]
    %v63 = vld [vmem:[#allocation2 + $0x38] sm:$0xff]
    %v64 = vld [vmem:[#allocation2 + $0x40] sm:$0xff]
    %v65 = vld [vmem:[#allocation2 + $0x48] sm:$0xff]
    %v66 = vld [vmem:[#allocation2 + $0x50] sm:$0xff]
    %v67 = vld [vmem:[#allocation2 + $0x58] sm:$0xff]
    %v68 = vld [vmem:[#allocation2 + $0x60] sm:$0xff]
    %v69 = vld [vmem:[#allocation2 + $0x68] sm:$0xff]
    %v70 = vld [vmem:[#allocation2 + $0x70] sm:$0xff]
    %v71 = vld [vmem:[#allocation2 + $0x78] sm:$0xff]
    %v72 = vld [vmem:[%s0] sm:$0xff]
    %v73 = vld [vmem:[%s0 + $0x8] sm:$0xff]
    %v74 = vld [vmem:[%s3] sm:$0x1]
    %75 = vmatpush.msra.mxu0 %v71
    %76 = vmatpush.msra.mxu0 %v70
    %77 = vmatpush.msra.mxu0 %v69
    %78 = vmatpush.msra.mxu0 %v68
    %79 = vmatpush.msra.mxu0 %v67
    %80 = vmatpush.msra.mxu0 %v66
    %81 = vmatpush.msra.mxu0 %v65
    %82 = vmatpush.msra.mxu0 %v64
    %83 = vmatpush.msra.mxu0 %v63
    %84 = vmatpush.msra.mxu0 %v62
    %85 = vmatpush.msra.mxu0 %v61
    %86 = vmatpush.msra.mxu0 %v60
    %87 = vmatpush.msra.mxu0 %v59
    %88 = vmatpush.msra.mxu0 %v58
    %89 = vmatpush.msra.mxu0 %v57
    %90 = vmatpush.msra.mxu0 %v56
    %91 = vmatmul.f32.gmra.mxu0 %v72
    %v92 = vpop.f32.mrf.mxu0
    %v93 = vadd.f32 0.0, %v92
    %94 = vmatmul.f32.gmra.mxu0 %v73
    %v95 = vpop.f32.mrf.mxu0
    %v96 = vadd.f32 0.0, %v95
    %97 = vdwg.mxu0
    %v98 = vmul.f32 %v93, 2.0
    %v99 = vmul.f32 %v96, 2.0
    %v101 = vperm.slane %v74, 0
    %v103 = vsub.f32 %v101, %v98
    %v104 = vsub.f32 %v101, %v99
    %v105 = vlaneseq
    %v106 = vand.u32 %v105, 127
    %vm107 = vcmask 130048
    %v108 = vsel %vm107, %v103, inf
    %109 = vmin.xlane.f32.xlu0 %v108
    %v110 = vpop.xlane.xlu0 %109
    %v111 = vsel %vm107, %v104, inf
    %112 = vmin.xlane.f32.xlu0 %v111
    %v113 = vpop.xlane.xlu0 %112
    %vm114 = vcmp.eq.f32.partialorder %v103, %v110
    %vm115 = vcmp.eq.f32.partialorder %v104, %v113
    %v116 = vsel %vm114, %v106, 16
    %v117 = vsel %vm115, %v106, 16
    %v118 = vsel %vm107, %v116, 2147483647
    %v119 = vand.u32 %v118, 65535
    %v120 = vshra.s32 %v118, 16
    %v121 = vcvt.s32.f32 %v119
    %v122 = vcvt.s32.f32 %v120
    %123 = vmin.xlane.f32.xlu0 %v122
    %v124 = vpop.xlane.xlu0 %123
    %vm125 = vcmp.eq.f32.partialorder %v122, %v124
    %v126 = vsel %vm125, %v121, inf
    %127 = vmin.xlane.f32.xlu0 %v126
    %v128 = vpop.xlane.xlu0 %127
    %v129 = vcvt.f32.s32 %v128
    %v130 = vcvt.f32.s32 %v124
    %v131 = vshll.u32 %v130, 16
    %v132 = vadd.s32 %v131, %v129
    %v133 = vsel %vm107, %v117, 2147483647
    %v134 = vand.u32 %v133, 65535
    %v135 = vshra.s32 %v133, 16
    %v136 = vcvt.s32.f32 %v134
    %v137 = vcvt.s32.f32 %v135
    %138 = vmin.xlane.f32.xlu0 %v137
    %v139 = vpop.xlane.xlu0 %138
    %vm140 = vcmp.eq.f32.partialorder %v137, %v139
    %v141 = vsel %vm140, %v136, inf
    %142 = vmin.xlane.f32.xlu0 %v141
    %v143 = vpop.xlane.xlu0 %142
    %v144 = vcvt.f32.s32 %v143
    %v145 = vcvt.f32.s32 %v139
    %v146 = vshll.u32 %v145, 16
    %v147 = vadd.s32 %v146, %v144
    %vm148 = vcmp.eq.s32.totalorder %v106, %v132
    %vm149 = vcmp.eq.s32.totalorder %v106, %v147
    %v150 = vsel %vm148, 1, 0
    %v151 = vsel %vm149, 1, 0
    %v152 = vcvt.s32.f32 %v150
    %v153 = vcvt.s32.f32 %v151
    %vm154 = vcmask 261248
    %v155 = vsel %vm154, %v103, inf
    %156 = vmin.xlane.f32.xlu0 %v155
    %v157 = vpop.xlane.xlu0 %156
    %v158 = vsel %vm154, %v104, inf
    %159 = vmin.xlane.f32.xlu0 %v158
    %v160 = vpop.xlane.xlu0 %159
    %vm161 = vcmp.eq.f32.partialorder %v103, %v157
    %vm162 = vcmp.eq.f32.partialorder %v104, %v160
    %163 = vrot.lane.b32.xlu0 %v106, 16
    %v164 = vpop.permute.xlu0 %163
    %v165 = vsel %vm161, %v164, 16
    %v166 = vsel %vm162, %v164, 16
    %v167 = vsel %vm154, %v165, 2147483647
    %v168 = vand.u32 %v167, 65535
    %v169 = vshra.s32 %v167, 16
    %v170 = vcvt.s32.f32 %v168
    %v171 = vcvt.s32.f32 %v169
    %172 = vmin.xlane.f32.xlu0 %v171
    %v173 = vpop.xlane.xlu0 %172
    %vm174 = vcmp.eq.f32.partialorder %v171, %v173
    %v175 = vsel %vm174, %v170, inf
    %176 = vmin.xlane.f32.xlu0 %v175
    %v177 = vpop.xlane.xlu0 %176
    %v178 = vcvt.f32.s32 %v177
    %v179 = vcvt.f32.s32 %v173
    %v180 = vshll.u32 %v179, 16
    %v181 = vadd.s32 %v180, %v178
    %v182 = vsel %vm154, %v166, 2147483647
    %v183 = vand.u32 %v182, 65535
    %v184 = vshra.s32 %v182, 16
    %v185 = vcvt.s32.f32 %v183
    %v186 = vcvt.s32.f32 %v184
    %187 = vmin.xlane.f32.xlu0 %v186
    %v188 = vpop.xlane.xlu0 %187
    %vm189 = vcmp.eq.f32.partialorder %v186, %v188
    %v190 = vsel %vm189, %v185, inf
    %191 = vmin.xlane.f32.xlu0 %v190
    %v192 = vpop.xlane.xlu0 %191
    %v193 = vcvt.f32.s32 %v192
    %v194 = vcvt.f32.s32 %v188
    %v195 = vshll.u32 %v194, 16
    %v196 = vadd.s32 %v195, %v193
    %vm197 = vcmp.eq.s32.totalorder %v106, %v181
    %vm198 = vcmp.eq.s32.totalorder %v106, %v196
    %v199 = vsel %vm197, 1, 0
    %v200 = vsel %vm198, 1, 0
    %v201 = vcvt.s32.f32 %v199
    %v202 = vcvt.s32.f32 %v200
    %vm203 = vcmask 392448
    %v204 = vsel %vm203, %v103, inf
    %205 = vmin.xlane.f32.xlu0 %v204
    %v206 = vpop.xlane.xlu0 %205
    %v207 = vsel %vm203, %v104, inf
    %208 = vmin.xlane.f32.xlu0 %v207
    %v209 = vpop.xlane.xlu0 %208
    %vm210 = vcmp.eq.f32.partialorder %v103, %v206
    %vm211 = vcmp.eq.f32.partialorder %v104, %v209
    %212 = vrot.lane.b32.xlu0 %v106, 32
    %v213 = vpop.permute.xlu0 %212
    %v214 = vsel %vm210, %v213, 16
    %v215 = vsel %vm211, %v213, 16
    %v216 = vsel %vm203, %v214, 2147483647
    %v217 = vand.u32 %v216, 65535
    %v218 = vshra.s32 %v216, 16
    %v219 = vcvt.s32.f32 %v217
    %v220 = vcvt.s32.f32 %v218
    %221 = vmin.xlane.f32.xlu0 %v220
    %v222 = vpop.xlane.xlu0 %221
    %vm223 = vcmp.eq.f32.partialorder %v220, %v222
    %v224 = vsel %vm223, %v219, inf
    %225 = vmin.xlane.f32.xlu0 %v224
    %v226 = vpop.xlane.xlu0 %225
    %v227 = vcvt.f32.s32 %v226
    %v228 = vcvt.f32.s32 %v222
    %v229 = vshll.u32 %v228, 16
    %v230 = vadd.s32 %v229, %v227
    %v231 = vsel %vm203, %v215, 2147483647
    %v232 = vand.u32 %v231, 65535
    %v233 = vshra.s32 %v231, 16
    %v234 = vcvt.s32.f32 %v232
    %v235 = vcvt.s32.f32 %v233
    %236 = vmin.xlane.f32.xlu0 %v235
    %v237 = vpop.xlane.xlu0 %236
    %vm238 = vcmp.eq.f32.partialorder %v235, %v237
    %v239 = vsel %vm238, %v234, inf
    %240 = vmin.xlane.f32.xlu0 %v239
    %v241 = vpop.xlane.xlu0 %240
    %v242 = vcvt.f32.s32 %v241
    %v243 = vcvt.f32.s32 %v237
    %v244 = vshll.u32 %v243, 16
    %v245 = vadd.s32 %v244, %v242
    %vm246 = vcmp.eq.s32.totalorder %v106, %v230
    %vm247 = vcmp.eq.s32.totalorder %v106, %v245
    %v248 = vsel %vm246, 1, 0
    %v249 = vsel %vm247, 1, 0
    %v250 = vcvt.s32.f32 %v248
    %v251 = vcvt.s32.f32 %v249
    %vm252 = vcmask 523648
    %v253 = vsel %vm252, %v103, inf
    %254 = vmin.xlane.f32.xlu0 %v253
    %v255 = vpop.xlane.xlu0 %254
    %v256 = vsel %vm252, %v104, inf
    %257 = vmin.xlane.f32.xlu0 %v256
    %v258 = vpop.xlane.xlu0 %257
    %vm259 = vcmp.eq.f32.partialorder %v103, %v255
    %vm260 = vcmp.eq.f32.partialorder %v104, %v258
    %261 = vrot.lane.b32.xlu0 %v106, 48
    %v262 = vpop.permute.xlu0 %261
    %v263 = vsel %vm259, %v262, 16
    %v264 = vsel %vm260, %v262, 16
    %v265 = vsel %vm252, %v263, 2147483647
    %v266 = vand.u32 %v265, 65535
    %v267 = vshra.s32 %v265, 16
    %v268 = vcvt.s32.f32 %v266
    %v269 = vcvt.s32.f32 %v267
    %270 = vmin.xlane.f32.xlu0 %v269
    %v271 = vpop.xlane.xlu0 %270
    %vm272 = vcmp.eq.f32.partialorder %v269, %v271
    %v273 = vsel %vm272, %v268, inf
    %274 = vmin.xlane.f32.xlu0 %v273
    %v275 = vpop.xlane.xlu0 %274
    %v276 = vcvt.f32.s32 %v275
    %v277 = vcvt.f32.s32 %v271
    %v278 = vshll.u32 %v277, 16
    %v279 = vadd.s32 %v278, %v276
    %v280 = vsel %vm252, %v264, 2147483647
    %v281 = vand.u32 %v280, 65535
    %v282 = vshra.s32 %v280, 16
    %v283 = vcvt.s32.f32 %v281
    %v284 = vcvt.s32.f32 %v282
    %285 = vmin.xlane.f32.xlu0 %v284
    %v286 = vpop.xlane.xlu0 %285
    %vm287 = vcmp.eq.f32.partialorder %v284, %v286
    %v288 = vsel %vm287, %v283, inf
    %289 = vmin.xlane.f32.xlu0 %v288
    %v290 = vpop.xlane.xlu0 %289
    %v291 = vcvt.f32.s32 %v290
    %v292 = vcvt.f32.s32 %v286
    %v293 = vshll.u32 %v292, 16
    %v294 = vadd.s32 %v293, %v291
    %vm295 = vcmp.eq.s32.totalorder %v106, %v279
    %vm296 = vcmp.eq.s32.totalorder %v106, %v294
    %v297 = vsel %vm295, 1, 0
    %v298 = vsel %vm296, 1, 0
    %v299 = vcvt.s32.f32 %v297
    %v300 = vcvt.s32.f32 %v298
    %303 = vrot.lane.b32.xlu0 %v201, 16
    %v304 = vpop.permute.xlu0 %303
    %305 = vrot.lane.b32.xlu0 %v202, 16
    %v306 = vpop.permute.xlu0 %305
    %311 = vrot.lane.b32.xlu0 %v250, 32
    %v312 = vpop.permute.xlu0 %311
    %313 = vrot.lane.b32.xlu0 %v251, 32
    %v314 = vpop.permute.xlu0 %313
    %319 = vrot.lane.b32.xlu0 %v299, 48
    %v320 = vpop.permute.xlu0 %319
    %321 = vrot.lane.b32.xlu0 %v300, 48
    %v322 = vpop.permute.xlu0 %321
    %v325 = vsel %vm107, %v152, %v304
    %v326 = vsel %vm107, %v153, %v306
    %vm327 = vcmask 261120
    %v328 = vsel %vm327, %v325, %v312
    %v329 = vsel %vm327, %v326, %v314
    %vm330 = vcmask 392192
    %v331 = vsel %vm330, %v328, %v320
    %v332 = vsel %vm330, %v329, %v322
    %vm333 = vcmask 523264
    %v334 = vsel %vm333, %v331, 0.0
    %v335 = vsel %vm333, %v332, 0.0
    %v336 = vld [vmem:[#allocation5] sm:$0xff]
    %v337 = vld [vmem:[#allocation5 + $0x8] sm:$0xff]
    %v338 = vld [vmem:[#allocation5 + $0x10] sm:$0xff]
    %v339 = vld [vmem:[#allocation5 + $0x18] sm:$0xff]
    %v340 = vld [vmem:[#allocation5 + $0x20] sm:$0xff]
    %v341 = vld [vmem:[#allocation5 + $0x28] sm:$0xff]
    %v342 = vld [vmem:[#allocation5 + $0x30] sm:$0xff]
    %v343 = vld [vmem:[#allocation5 + $0x38] sm:$0xff]
    %v344 = vld [vmem:[#allocation5 + $0x40] sm:$0xff]
    %v345 = vld [vmem:[#allocation5 + $0x48] sm:$0xff]
    %v346 = vld [vmem:[#allocation5 + $0x50] sm:$0xff]
    %v347 = vld [vmem:[#allocation5 + $0x58] sm:$0xff]
    %v348 = vld [vmem:[#allocation5 + $0x60] sm:$0xff]
    %v349 = vld [vmem:[#allocation5 + $0x68] sm:$0xff]
    %v350 = vld [vmem:[#allocation5 + $0x70] sm:$0xff]
    %v351 = vld [vmem:[#allocation5 + $0x78] sm:$0xff]
    %352 = vmatpush.msra.mxu0 %v351
    %353 = vmatpush.msra.mxu0 %v350
    %354 = vmatpush.msra.mxu0 %v349
    %355 = vmatpush.msra.mxu0 %v348
    %356 = vmatpush.msra.mxu0 %v347
    %357 = vmatpush.msra.mxu0 %v346
    %358 = vmatpush.msra.mxu0 %v345
    %359 = vmatpush.msra.mxu0 %v344
    %360 = vmatpush.msra.mxu0 %v343
    %361 = vmatpush.msra.mxu0 %v342
    %362 = vmatpush.msra.mxu0 %v341
    %363 = vmatpush.msra.mxu0 %v340
    %364 = vmatpush.msra.mxu0 %v339
    %365 = vmatpush.msra.mxu0 %v338
    %366 = vmatpush.msra.mxu0 %v337
    %367 = vmatpush.msra.mxu0 %v336
    %368 = vmatmul.f32.gmra.mxu0 %v334
    %v369 = vpop.f32.mrf.mxu0
    %v370 = vadd.f32 0.0, %v369
    %371 = vmatmul.f32.gmra.mxu0 %v335
    %v372 = vpop.f32.mrf.mxu0
    %v373 = vadd.f32 0.0, %v372
    %374 = vdwg.mxu0
    %375 = vst [vmem:[#allocation7] sm:$0xff] %v370
    %376 = vst [vmem:[#allocation7 + $0x8] sm:$0xff] %v373
    %v377 = vld [vmem:[%s4] sm:$0xff]
    %v378 = vld [vmem:[%s4 + $0x8] sm:$0xff]
    %v379 = vld [vmem:[%s0] sm:$0xff]
    %v380 = vld [vmem:[%s0 + $0x8] sm:$0xff]
    %v381 = vsub.f32 %v370, %v379
    %v382 = vsub.f32 %v373, %v380
    %v383 = vmul.f32 %v381, %v381
    %v384 = vmul.f32 %v382, %v382
    %385 = vadd.xlane.f32.xlu0 %v383
    %v386 = vpop.xlane.xlu0 %385
    %387 = vadd.xlane.f32.xlu0 %v384
    %v388 = vpop.xlane.xlu0 %387
    %v389 = vmul.f32 %v386, %v377
    %v390 = vmul.f32 %v388, %v378
    %vm391 = vcmask 7168
    %v392 = vsel %vm391, %v389, 0.0
    %v393 = vsel %vm391, %v390, 0.0
    %v394 = vadd.f32 %v392, %v393
    %395 = vadd.xlane.f32.xlu0 %v394
    %v396 = vpop.xlane.xlu0 %395
    %v397 = vrot.slane %v396, 4
    %v398 = vadd.f32 %v396, %v397
    %v399 = vrot.slane %v398, 2
    %v400 = vadd.f32 %v398, %v399
    %v401 = vrot.slane %v400, 1
    %v402 = vadd.f32 %v400, %v401
    %s403 = vtos %v402
    %v404 = vstv %s403
    %405 = vst [vmem:[#allocation8] sm:$0xff] %v404
    // Predicated region
    $region30: #{tpu_custom_call.1} parent=1 // pred_check
      _
    $region31: #{tpu_custom_call.1} parent=1 // pred_check_branch
      %407 = sbr.rel (0) target = $region33
    $region32: #{tpu_custom_call.1} parent=1 // pred_region
      %409 = vsyncadd [#allocation4], 0
      %s410 = sshll.u32 [#allocation7], 4
      %s411 = int_to_ptr.vmem [resolvable:$true] %s410
      %s412 = sshll.u32 %s5, 4
      %s413 = int_to_ptr.hbm [resolvable:$true] %s412
      %418 = dma.vmem_to_hbm [thread:$0]  %s411, 256, %s413, [#allocation4], 128, 128, 8
    $region33: #{tpu_custom_call.1} parent=1 // pred_fallthru
      _
    // Predicated region
    $region34: #{tpu_custom_call.1} parent=1 // pred_check
      _
    $region35: #{tpu_custom_call.1} parent=1 // pred_check_branch
      %420 = sbr.rel (0) target = $region37
    $region36: #{tpu_custom_call.1} parent=1 // pred_region
      %422 = vsyncadd [#allocation9], 0
      %s424 = sshll.u32 [#allocation8], 4
      %s425 = int_to_ptr.vmem [resolvable:$true] %s424
      %s426 = sshll.u32 %s6, 4
      %s427 = int_to_ptr.hbm [resolvable:$true] %s426
      %429 = dma.vmem_to_hbm [thread:$0]  %s425, 128, %s427, [#allocation9]
    $region37: #{tpu_custom_call.1} parent=1 // pred_fallthru
      _
    // Predicated region
    $region38: #{tpu_custom_call.1} parent=1 // pred_check
      _
    $region39: #{tpu_custom_call.1} parent=1 // pred_check_branch
      %431 = sbr.rel (0) target = $region41
    $region40: #{tpu_custom_call.1} parent=1 // pred_region
      %433 = dma.done [#allocation4], 256
    $region41: #{tpu_custom_call.1} parent=1 // pred_fallthru
      _
    // Predicated region
    $region42: #{tpu_custom_call.1} parent=1 // pred_check
      _
    $region43: #{tpu_custom_call.1} parent=1 // pred_check_branch
      %435 = sbr.rel (0) target = $region45
    $region44: #{tpu_custom_call.1} parent=1 // pred_region
      %437 = dma.done [#allocation9], 128
    $region45: #{tpu_custom_call.1} parent=1 // pred_fallthru
      _
    %438 = vsyncpa [#allocation3], 1
    %439 = vsyncpa [#allocation6], 1
    %440 = vsyncpa [#allocation4], 1
    %441 = vsyncpa [#allocation9], 1

</llo_original>
